<compile_context>
chip_gen: v6e
topology: v6e:2x2x1
jax: 0.10.0
libtpu: 0.0.40
codegen_flags: <defaults>
</compile_context>

<pallas_src>
import math
import numpy as np

import jax
import jax.numpy as jnp
from jax import lax
from jax.experimental import pallas as pl
from jax.experimental.pallas import tpu as pltpu


# ----------------------------------------------------------------------------
# Pallas kernel: complex contraction over the input-channel axis, carried out
# on separate real/imag planes (all float32, pure VPU elementwise work --
# the MXU is not applicable since the weight varies per mode).
#   out_r[b,d,m] = sum_c xr[b,c,m]*wr[c,d,m] - xi[b,c,m]*wi[c,d,m]
#   out_i[b,d,m] = sum_c xr[b,c,m]*wi[c,d,m] + xi[b,c,m]*wr[c,d,m]
# ----------------------------------------------------------------------------
def _make_contract_kernel(cin):
    def kernel(xr_ref, xi_ref, wr_ref, wi_ref, or_ref, oi_ref):
        shape = or_ref.shape
        acc_r = jnp.zeros(shape, jnp.float32)
        acc_i = jnp.zeros(shape, jnp.float32)
        if cin <= 16:
            # Small static channel count: fully static per-channel loads keep
            # live ranges bounded (no full x/w tile materialized as a value).
            # TODO(synk): a stride-0 pl.ds sublane-broadcast load of the x row
            # across the Cout sublanes would move the broadcast from XLU to a
            # plain dense vld; kept as a value-domain broadcast for portability.
            for c in range(cin):
                xr_c = xr_ref[:, c:c + 1, :]        # (B, 1, TM)
                xi_c = xi_ref[:, c:c + 1, :]
                wr_c = wr_ref[c:c + 1, :, :]        # (1, Cout, TM)
                wi_c = wi_ref[c:c + 1, :, :]
                acc_r = acc_r + xr_c * wr_c - xi_c * wi_c
                acc_i = acc_i + xr_c * wi_c + xi_c * wr_c
        else:
            # Large channel counts: bounded unroll keeps code size / vreg
            # pressure in check; per-channel ref loads inside the loop.
            def body(c, carry):
                a_r, a_i = carry
                xr_c = xr_ref[:, pl.ds(c, 1), :]
                xi_c = xi_ref[:, pl.ds(c, 1), :]
                wr_c = wr_ref[pl.ds(c, 1)]
                wi_c = wi_ref[pl.ds(c, 1)]
                a_r = a_r + xr_c * wr_c - xi_c * wi_c
                a_i = a_i + xr_c * wi_c + xi_c * wr_c
                return a_r, a_i
            acc_r, acc_i = lax.fori_loop(0, cin, body, (acc_r, acc_i), unroll=4)
        or_ref[...] = acc_r
        oi_ref[...] = acc_i
    return kernel


# ----------------------------------------------------------------------------
# Generation-dependent tiling parameters.
# ----------------------------------------------------------------------------
def _tpu_generation_params():
    kind = ""
    try:
        kind = jax.devices()[0].device_kind.lower()
    except Exception:
        pass
    if "v7" in kind:
        # v7x: only 64 MiB VMEM per TC; 2 TCs per chip -> keep grid >= 2.
        return dict(budget_bytes=20 << 20, vmem_limit_bytes=48 << 20,
                    force_grid2=True)
    if "v6" in kind or "v5" in kind:
        # v5e / v6e: 128 MiB physical VMEM (scoped default 16/32 MiB) -> raise
        # both the tiling budget and the scoped limit for bigger lane tiles.
        return dict(budget_bytes=56 << 20, vmem_limit_bytes=96 << 20,
                    force_grid2=False)
    # Unknown part: conservative values that are safe on a 64 MiB-VMEM chip.
    return dict(budget_bytes=20 << 20, vmem_limit_bytes=48 << 20,
                force_grid2=False)


def _choose_tile_m(B, Cin, Cout, M, budget_bytes, force_grid2):
    """Largest lane tile whose double-buffered working set fits the budget."""
    # f32 rows resident per lane-tile across all 6 streams (xr,xi,wr,wi,or,oi).
    rows = 2 * (B * Cin) + 2 * (Cin * Cout) + 2 * (B * Cout)
    bytes_per_lane = rows * 4 * 2            # x2 for pipeline double-buffering
    max_lanes = max(128, budget_bytes // bytes_per_lane)
    if force_grid2 and M > 128:
        # v7x: cap the tile so the 1-D grid has >= 2 blocks (both TensorCores).
        half = ((pl.cdiv(M, 2) + 127) // 128) * 128
        max_lanes = min(max_lanes, half)
    if M <= max_lanes:
        # Single block: no padding needed (block last dim == full array dim).
        # TODO(synk): pipeline_mode=pl.Buffered(1) would reclaim the unused
        # double buffer for grid=1 on v5e/v6e.
        return M
    return int(max(128, min(2048, (max_lanes // 128) * 128)))


# ----------------------------------------------------------------------------
# Wrapper around pallas_call.
# ----------------------------------------------------------------------------
def pallas_spectral_contract(xr, xi, wr, wi, *, tile_m=None):
    """xr, xi: (B, Cin, M) f32; wr, wi: (Cin, Cout, M) f32 -> (out_r, out_i)."""
    B, Cin, M = xr.shape
    Cout = wr.shape[1]

    params = _tpu_generation_params()
    if tile_m is None:
        tile_m = _choose_tile_m(B, Cin, Cout, M,
                                params["budget_bytes"], params["force_grid2"])
    grid = (pl.cdiv(M, tile_m),)

    flops = 8 * B * Cin * Cout * M                 # 4 mul + 4 add per (b,d,c,m)
    bytes_accessed = 4 * (2 * B * Cin * M + 2 * Cin * Cout * M + 2 * B * Cout * M)

    out_r, out_i = pl.pallas_call(
        _make_contract_kernel(Cin),
        out_shape=(jax.ShapeDtypeStruct((B, Cout, M), jnp.float32),
                   jax.ShapeDtypeStruct((B, Cout, M), jnp.float32)),
        grid=grid,
        in_specs=[pl.BlockSpec((B, Cin, tile_m), lambda i: (0, 0, i)),
                  pl.BlockSpec((B, Cin, tile_m), lambda i: (0, 0, i)),
                  pl.BlockSpec((Cin, Cout, tile_m), lambda i: (0, 0, i)),
                  pl.BlockSpec((Cin, Cout, tile_m), lambda i: (0, 0, i))],
        out_specs=[pl.BlockSpec((B, Cout, tile_m), lambda i: (0, 0, i)),
                   pl.BlockSpec((B, Cout, tile_m), lambda i: (0, 0, i))],
        compiler_params=pltpu.CompilerParams(
            dimension_semantics=("parallel",),
            vmem_limit_bytes=params["vmem_limit_bytes"]),
        cost_estimate=pl.CostEstimate(flops=flops, transcendentals=0,
                                      bytes_accessed=bytes_accessed),
    )(xr, xi, wr, wi)
    return out_r, out_i


# ----------------------------------------------------------------------------
# Weight preprocessing -- hoisted out of the per-step forward (amortized).
# ----------------------------------------------------------------------------
def prepare_spectral_weights(weight_real, indices, n_modes, max_n_modes, fft_size):
    """Slice the layer weight (same arithmetic as the PyTorch reference) and
    return flattened real/imag planes plus the sliced mode shape."""
    w = (weight_real[indices][..., 0]
         + 1j * weight_real[indices][..., 1]).astype(jnp.complex64)
    starts = [mx - min(sz, nm) for sz, nm, mx in zip(fft_size, n_modes, max_n_modes)]
    slices_w = [slice(None), slice(None)]
    slices_w += [slice(s // 2, -s // 2) if s else slice(s, None) for s in starts[:-1]]
    slices_w += [slice(None, -starts[-1]) if starts[-1] else slice(None)]
    w = w[tuple(slices_w)]
    Cin, Cout = w.shape[0], w.shape[1]
    w_mode_shape = tuple(int(s) for s in w.shape[2:])
    M = int(np.prod(w_mode_shape))
    wr = jnp.real(w).astype(jnp.float32).reshape(Cin, Cout, M)
    wi = jnp.imag(w).astype(jnp.float32).reshape(Cin, Cout, M)
    return wr, wi, w_mode_shape


# ----------------------------------------------------------------------------
# Full SpectralConv forward (matches the PyTorch reference semantics).
# ----------------------------------------------------------------------------
def spectral_conv_forward(x, wr_flat, wi_flat, w_mode_shape, bias_l,
                          use_pallas=True):
    """
    x            : (B, Cin, X, Y, Z) float32
    wr_flat/wi_flat : (Cin, Cout, M) float32 (pre-sliced, pre-flattened weights)
    w_mode_shape : static tuple of sliced mode sizes, prod == M
    bias_l       : (Cout, 1, 1, 1) float32
    """
    B, Cin = x.shape[0], x.shape[1]
    Cout = wr_flat.shape[1]
    mode_sizes = list(x.shape[2:])
    order = len(mode_sizes)
    fft_size = list(mode_sizes)
    fft_size[-1] = fft_size[-1] // 2 + 1
    fft_dims = list(range(-order, 0))

    # TODO(synk): rfftn / fftshift / irfftn have no Pallas TPU primitive; they
    # stay in plain JAX (XLA FFT).
    xf = jnp.fft.rfftn(x, axes=fft_dims, norm="backward")
    if order > 1:
        xf = jnp.fft.fftshift(xf, axes=fft_dims[:-1])

    # --- slice the centered spectrum to the weight mode window ---
    starts = [sz - min(sz, nm) for sz, nm in zip(fft_size, list(w_mode_shape))]
    slices_x = [slice(None), slice(None)]
    slices_x += [slice(s // 2, -s // 2) if s else slice(s, None) for s in starts[:-1]]
    slices_x += [slice(None, -starts[-1]) if starts[-1] else slice(None)]
    x_sl = xf[tuple(slices_x)]                       # (B, Cin, *w_mode_shape)

    M = int(np.prod(w_mode_shape))

    # --- hot path: per-mode complex channel mixing ---
    if use_pallas:
        xr = jnp.real(x_sl).astype(jnp.float32).reshape(B, Cin, M)
        xi = jnp.imag(x_sl).astype(jnp.float32).reshape(B, Cin, M)
        out_r, out_i = pallas_spectral_contract(xr, xi, wr_flat, wi_flat)
        out_sl = lax.complex(out_r, out_i).reshape(B, Cout, *w_mode_shape)
    else:  # pure-JAX reference path for verification
        w_c = (wr_flat + 1j * wi_flat).reshape(Cin, Cout, *w_mode_shape)
        out_sl = jnp.einsum("bcxyz,cdxyz->bdxyz", x_sl, w_c.astype(jnp.complex64))

    out_fft = jnp.zeros((B, Cout, *fft_size), dtype=jnp.complex64)
    out_fft = out_fft.at[tuple(slices_x)].set(out_sl)

    if order > 1:
        out_fft = jnp.fft.ifftshift(out_fft, axes=fft_dims[:-1])
    xo = jnp.fft.irfftn(out_fft, s=mode_sizes, axes=fft_dims, norm="backward")
    return xo + bias_l


# ----------------------------------------------------------------------------
# Main
# ----------------------------------------------------------------------------
if __name__ == "__main__":
    # Small shapes consistent with the module (order-3 SpectralConv).
    B, Cin, Cout = 2, 4, 4
    X = Y = Z = 16
    n_layers = 1
    raw_n_modes = (8, 8, 8)

    # Property-setter semantics: last mode count -> m//2 + 1
    n_modes = list(raw_n_modes)
    n_modes[-1] = n_modes[-1] // 2 + 1            # [8, 8, 5]
    max_n_modes = list(n_modes)

    key = jax.random.PRNGKey(0)
    k_x, k_w, k_b = jax.random.split(key, 3)

    std = math.sqrt(2.0 / (Cin + Cout))
    # weight: (n_layers, Cin, Cout, *max_n_modes, 2)  -- view_as_real layout
    weight_real = std * jax.random.normal(
        k_w, (n_layers, Cin, Cout, *max_n_modes, 2), dtype=jnp.float32)
    bias = std * jax.random.normal(
        k_b, (n_layers, Cout, 1, 1, 1), dtype=jnp.float32)

    x = jax.random.normal(k_x, (B, Cin, X, Y, Z), dtype=jnp.float32)

    mode_sizes = [X, Y, Z]
    fft_size = list(mode_sizes)
    fft_size[-1] = fft_size[-1] // 2 + 1

    # Weight preprocessing done once, outside the per-step jitted forward.
    wr_flat, wi_flat, w_mode_shape = prepare_spectral_weights(
        weight_real, 0, n_modes, max_n_modes, fft_size)
    wr_flat = jax.block_until_ready(wr_flat)
    wi_flat = jax.block_until_ready(wi_flat)
    bias_l = bias[0]

    fwd = jax.jit(lambda xx: spectral_conv_forward(
        xx, wr_flat, wi_flat, w_mode_shape, bias_l, use_pallas=True))
    out = jax.block_until_ready(fwd(x))

    # Correctness check against the pure-JAX (einsum) reference path.
    ref = spectral_conv_forward(x, wr_flat, wi_flat, w_mode_shape, bias_l,
                                use_pallas=False)
    ref = jax.block_until_ready(ref)
    assert out.shape == (B, Cout, X, Y, Z)
    np.testing.assert_allclose(np.asarray(out), np.asarray(ref),
                               rtol=1e-4, atol=1e-4)

    print("KERNEL_OK")
</pallas_src>

<mosaic_0001>
module attributes {stable_mosaic.version = 11 : i64} {
  func.func @kernel(%arg0: i32, %arg1: memref<2x4x320xf32, #tpu.memory_space<vmem>>, %arg2: memref<2x4x320xf32, #tpu.memory_space<vmem>>, %arg3: memref<4x4x320xf32, #tpu.memory_space<vmem>>, %arg4: memref<4x4x320xf32, #tpu.memory_space<vmem>>, %arg5: memref<2x4x320xf32, #tpu.memory_space<vmem>>, %arg6: memref<2x4x320xf32, #tpu.memory_space<vmem>>) attributes {dimension_semantics = [#tpu.dimension_semantics<parallel>], iteration_bounds = array<i64: 1>, scalar_prefetch = 0 : i64, scratch_operands = 0 : i64, tpu.core_type = #tpu.core_type<tc>, window_params = [{transform_indices = @transform_0, window_bounds = array<i64: 2, 4, 320>}, {transform_indices = @transform_1, window_bounds = array<i64: 2, 4, 320>}, {transform_indices = @transform_2, window_bounds = array<i64: 4, 4, 320>}, {transform_indices = @transform_3, window_bounds = array<i64: 4, 4, 320>}, {transform_indices = @transform_4, window_bounds = array<i64: 2, 4, 320>}, {transform_indices = @transform_5, window_bounds = array<i64: 2, 4, 320>}]} {
    %cst = arith.constant 0.000000e+00 : f32
    %0 = vector.broadcast %cst : f32 to vector<2x4x320xf32>
    %cst_0 = arith.constant 0.000000e+00 : f32
    %1 = vector.broadcast %cst_0 : f32 to vector<2x4x320xf32>
    %c0 = arith.constant 0 : index
    %c0_1 = arith.constant 0 : index
    %c0_2 = arith.constant 0 : index
    %2 = vector.load %arg1[%c0, %c0_1, %c0_2] : memref<2x4x320xf32, #tpu.memory_space<vmem>>, vector<2x1x320xf32>
    %c0_3 = arith.constant 0 : index
    %c0_4 = arith.constant 0 : index
    %c0_5 = arith.constant 0 : index
    %3 = vector.load %arg2[%c0_3, %c0_4, %c0_5] : memref<2x4x320xf32, #tpu.memory_space<vmem>>, vector<2x1x320xf32>
    %c0_6 = arith.constant 0 : index
    %c0_7 = arith.constant 0 : index
    %c0_8 = arith.constant 0 : index
    %4 = vector.load %arg3[%c0_6, %c0_7, %c0_8] : memref<4x4x320xf32, #tpu.memory_space<vmem>>, vector<1x4x320xf32>
    %c0_9 = arith.constant 0 : index
    %c0_10 = arith.constant 0 : index
    %c0_11 = arith.constant 0 : index
    %5 = vector.load %arg4[%c0_9, %c0_10, %c0_11] : memref<4x4x320xf32, #tpu.memory_space<vmem>>, vector<1x4x320xf32>
    %6 = vector.broadcast %2 : vector<2x1x320xf32> to vector<2x4x320xf32>
    %7 = vector.broadcast %4 : vector<1x4x320xf32> to vector<2x4x320xf32>
    %8 = arith.mulf %6, %7 : vector<2x4x320xf32>
    %9 = arith.addf %0, %8 : vector<2x4x320xf32>
    %10 = vector.broadcast %3 : vector<2x1x320xf32> to vector<2x4x320xf32>
    %11 = vector.broadcast %5 : vector<1x4x320xf32> to vector<2x4x320xf32>
    %12 = arith.mulf %10, %11 : vector<2x4x320xf32>
    %13 = arith.subf %9, %12 : vector<2x4x320xf32>
    %14 = vector.broadcast %2 : vector<2x1x320xf32> to vector<2x4x320xf32>
    %15 = vector.broadcast %5 : vector<1x4x320xf32> to vector<2x4x320xf32>
    %16 = arith.mulf %14, %15 : vector<2x4x320xf32>
    %17 = arith.addf %1, %16 : vector<2x4x320xf32>
    %18 = vector.broadcast %3 : vector<2x1x320xf32> to vector<2x4x320xf32>
    %19 = vector.broadcast %4 : vector<1x4x320xf32> to vector<2x4x320xf32>
    %20 = arith.mulf %18, %19 : vector<2x4x320xf32>
    %21 = arith.addf %17, %20 : vector<2x4x320xf32>
    %c0_12 = arith.constant 0 : index
    %c1 = arith.constant 1 : index
    %c0_13 = arith.constant 0 : index
    %22 = vector.load %arg1[%c0_12, %c1, %c0_13] : memref<2x4x320xf32, #tpu.memory_space<vmem>>, vector<2x1x320xf32>
    %c0_14 = arith.constant 0 : index
    %c1_15 = arith.constant 1 : index
    %c0_16 = arith.constant 0 : index
    %23 = vector.load %arg2[%c0_14, %c1_15, %c0_16] : memref<2x4x320xf32, #tpu.memory_space<vmem>>, vector<2x1x320xf32>
    %c1_17 = arith.constant 1 : index
    %c0_18 = arith.constant 0 : index
    %c0_19 = arith.constant 0 : index
    %24 = vector.load %arg3[%c1_17, %c0_18, %c0_19] : memref<4x4x320xf32, #tpu.memory_space<vmem>>, vector<1x4x320xf32>
    %c1_20 = arith.constant 1 : index
    %c0_21 = arith.constant 0 : index
    %c0_22 = arith.constant 0 : index
    %25 = vector.load %arg4[%c1_20, %c0_21, %c0_22] : memref<4x4x320xf32, #tpu.memory_space<vmem>>, vector<1x4x320xf32>
    %26 = vector.broadcast %22 : vector<2x1x320xf32> to vector<2x4x320xf32>
    %27 = vector.broadcast %24 : vector<1x4x320xf32> to vector<2x4x320xf32>
    %28 = arith.mulf %26, %27 : vector<2x4x320xf32>
    %29 = arith.addf %13, %28 : vector<2x4x320xf32>
    %30 = vector.broadcast %23 : vector<2x1x320xf32> to vector<2x4x320xf32>
    %31 = vector.broadcast %25 : vector<1x4x320xf32> to vector<2x4x320xf32>
    %32 = arith.mulf %30, %31 : vector<2x4x320xf32>
    %33 = arith.subf %29, %32 : vector<2x4x320xf32>
    %34 = vector.broadcast %22 : vector<2x1x320xf32> to vector<2x4x320xf32>
    %35 = vector.broadcast %25 : vector<1x4x320xf32> to vector<2x4x320xf32>
    %36 = arith.mulf %34, %35 : vector<2x4x320xf32>
    %37 = arith.addf %21, %36 : vector<2x4x320xf32>
    %38 = vector.broadcast %23 : vector<2x1x320xf32> to vector<2x4x320xf32>
    %39 = vector.broadcast %24 : vector<1x4x320xf32> to vector<2x4x320xf32>
    %40 = arith.mulf %38, %39 : vector<2x4x320xf32>
    %41 = arith.addf %37, %40 : vector<2x4x320xf32>
    %c0_23 = arith.constant 0 : index
    %c2 = arith.constant 2 : index
    %c0_24 = arith.constant 0 : index
    %42 = vector.load %arg1[%c0_23, %c2, %c0_24] : memref<2x4x320xf32, #tpu.memory_space<vmem>>, vector<2x1x320xf32>
    %c0_25 = arith.constant 0 : index
    %c2_26 = arith.constant 2 : index
    %c0_27 = arith.constant 0 : index
    %43 = vector.load %arg2[%c0_25, %c2_26, %c0_27] : memref<2x4x320xf32, #tpu.memory_space<vmem>>, vector<2x1x320xf32>
    %c2_28 = arith.constant 2 : index
    %c0_29 = arith.constant 0 : index
    %c0_30 = arith.constant 0 : index
    %44 = vector.load %arg3[%c2_28, %c0_29, %c0_30] : memref<4x4x320xf32, #tpu.memory_space<vmem>>, vector<1x4x320xf32>
    %c2_31 = arith.constant 2 : index
    %c0_32 = arith.constant 0 : index
    %c0_33 = arith.constant 0 : index
    %45 = vector.load %arg4[%c2_31, %c0_32, %c0_33] : memref<4x4x320xf32, #tpu.memory_space<vmem>>, vector<1x4x320xf32>
    %46 = vector.broadcast %42 : vector<2x1x320xf32> to vector<2x4x320xf32>
    %47 = vector.broadcast %44 : vector<1x4x320xf32> to vector<2x4x320xf32>
    %48 = arith.mulf %46, %47 : vector<2x4x320xf32>
    %49 = arith.addf %33, %48 : vector<2x4x320xf32>
    %50 = vector.broadcast %43 : vector<2x1x320xf32> to vector<2x4x320xf32>
    %51 = vector.broadcast %45 : vector<1x4x320xf32> to vector<2x4x320xf32>
    %52 = arith.mulf %50, %51 : vector<2x4x320xf32>
    %53 = arith.subf %49, %52 : vector<2x4x320xf32>
    %54 = vector.broadcast %42 : vector<2x1x320xf32> to vector<2x4x320xf32>
    %55 = vector.broadcast %45 : vector<1x4x320xf32> to vector<2x4x320xf32>
    %56 = arith.mulf %54, %55 : vector<2x4x320xf32>
    %57 = arith.addf %41, %56 : vector<2x4x320xf32>
    %58 = vector.broadcast %43 : vector<2x1x320xf32> to vector<2x4x320xf32>
    %59 = vector.broadcast %44 : vector<1x4x320xf32> to vector<2x4x320xf32>
    %60 = arith.mulf %58, %59 : vector<2x4x320xf32>
    %61 = arith.addf %57, %60 : vector<2x4x320xf32>
    %c0_34 = arith.constant 0 : index
    %c3 = arith.constant 3 : index
    %c0_35 = arith.constant 0 : index
    %62 = vector.load %arg1[%c0_34, %c3, %c0_35] : memref<2x4x320xf32, #tpu.memory_space<vmem>>, vector<2x1x320xf32>
    %c0_36 = arith.constant 0 : index
    %c3_37 = arith.constant 3 : index
    %c0_38 = arith.constant 0 : index
    %63 = vector.load %arg2[%c0_36, %c3_37, %c0_38] : memref<2x4x320xf32, #tpu.memory_space<vmem>>, vector<2x1x320xf32>
    %c3_39 = arith.constant 3 : index
    %c0_40 = arith.constant 0 : index
    %c0_41 = arith.constant 0 : index
    %64 = vector.load %arg3[%c3_39, %c0_40, %c0_41] : memref<4x4x320xf32, #tpu.memory_space<vmem>>, vector<1x4x320xf32>
    %c3_42 = arith.constant 3 : index
    %c0_43 = arith.constant 0 : index
    %c0_44 = arith.constant 0 : index
    %65 = vector.load %arg4[%c3_42, %c0_43, %c0_44] : memref<4x4x320xf32, #tpu.memory_space<vmem>>, vector<1x4x320xf32>
    %66 = vector.broadcast %62 : vector<2x1x320xf32> to vector<2x4x320xf32>
    %67 = vector.broadcast %64 : vector<1x4x320xf32> to vector<2x4x320xf32>
    %68 = arith.mulf %66, %67 : vector<2x4x320xf32>
    %69 = arith.addf %53, %68 : vector<2x4x320xf32>
    %70 = vector.broadcast %63 : vector<2x1x320xf32> to vector<2x4x320xf32>
    %71 = vector.broadcast %65 : vector<1x4x320xf32> to vector<2x4x320xf32>
    %72 = arith.mulf %70, %71 : vector<2x4x320xf32>
    %73 = arith.subf %69, %72 : vector<2x4x320xf32>
    %74 = vector.broadcast %62 : vector<2x1x320xf32> to vector<2x4x320xf32>
    %75 = vector.broadcast %65 : vector<1x4x320xf32> to vector<2x4x320xf32>
    %76 = arith.mulf %74, %75 : vector<2x4x320xf32>
    %77 = arith.addf %61, %76 : vector<2x4x320xf32>
    %78 = vector.broadcast %63 : vector<2x1x320xf32> to vector<2x4x320xf32>
    %79 = vector.broadcast %64 : vector<1x4x320xf32> to vector<2x4x320xf32>
    %80 = arith.mulf %78, %79 : vector<2x4x320xf32>
    %81 = arith.addf %77, %80 : vector<2x4x320xf32>
    %c0_45 = arith.constant 0 : index
    %c0_46 = arith.constant 0 : index
    %c0_47 = arith.constant 0 : index
    %82 = vector.load %arg5[%c0_45, %c0_46, %c0_47] : memref<2x4x320xf32, #tpu.memory_space<vmem>>, vector<2x4x320xf32>
    tpu.vector_store %arg5[%c0_45, %c0_46, %c0_47], %73 {strides = array<i32>} : memref<2x4x320xf32, #tpu.memory_space<vmem>>, vector<2x4x320xf32>,
    %c0_48 = arith.constant 0 : index
    %c0_49 = arith.constant 0 : index
    %c0_50 = arith.constant 0 : index
    %83 = vector.load %arg6[%c0_48, %c0_49, %c0_50] : memref<2x4x320xf32, #tpu.memory_space<vmem>>, vector<2x4x320xf32>
    tpu.vector_store %arg6[%c0_48, %c0_49, %c0_50], %81 {strides = array<i32>} : memref<2x4x320xf32, #tpu.memory_space<vmem>>, vector<2x4x320xf32>,
    return
  }
  func.func @transform_0(%arg0: i32) -> (i32, i32, i32) {
    %c0_i32 = arith.constant 0 : i32
    %c0_i32_0 = arith.constant 0 : i32
    %c0_i32_1 = arith.constant 0 : i32
    return %c0_i32, %c0_i32_0, %arg0 : i32, i32, i32
  }
  func.func @transform_1(%arg0: i32) -> (i32, i32, i32) {
    %c0_i32 = arith.constant 0 : i32
    %c0_i32_0 = arith.constant 0 : i32
    %c0_i32_1 = arith.constant 0 : i32
    return %c0_i32, %c0_i32_0, %arg0 : i32, i32, i32
  }
  func.func @transform_2(%arg0: i32) -> (i32, i32, i32) {
    %c0_i32 = arith.constant 0 : i32
    %c0_i32_0 = arith.constant 0 : i32
    %c0_i32_1 = arith.constant 0 : i32
    return %c0_i32, %c0_i32_0, %arg0 : i32, i32, i32
  }
  func.func @transform_3(%arg0: i32) -> (i32, i32, i32) {
    %c0_i32 = arith.constant 0 : i32
    %c0_i32_0 = arith.constant 0 : i32
    %c0_i32_1 = arith.constant 0 : i32
    return %c0_i32, %c0_i32_0, %arg0 : i32, i32, i32
  }
  func.func @transform_4(%arg0: i32) -> (i32, i32, i32) {
    %c0_i32 = arith.constant 0 : i32
    %c0_i32_0 = arith.constant 0 : i32
    %c0_i32_1 = arith.constant 0 : i32
    return %c0_i32, %c0_i32_0, %arg0 : i32, i32, i32
  }
  func.func @transform_5(%arg0: i32) -> (i32, i32, i32) {
    %c0_i32 = arith.constant 0 : i32
    %c0_i32_0 = arith.constant 0 : i32
    %c0_i32_1 = arith.constant 0 : i32
    return %c0_i32, %c0_i32_0, %arg0 : i32, i32, i32
  }
}

</mosaic_0001>

<llo_original>
// kernel: _lambda_.1
$region0: #{_lambda_.1}
  #allocation0 [shape = 'u32[]', space=smem, size = 0x4, offset = 0x4, fixed_abs, tag = 'smem constant byte address 0x4 - core index']
  #allocation1 [shape = 'u32[144,128]{1,0:T(1,128)}', space=vmem, size = 0x12000, scoped, tag = 'internal scratch']
  %s0 = inlined_call_operand.vmem [shape: f32[2,4,320], index: 0, kind: input, shape index: {}]
  %s1 = inlined_call_operand.vmem [shape: f32[2,4,320], index: 1, kind: input, shape index: {}]
  %s2 = inlined_call_operand.vmem [shape: f32[4,4,320], index: 2, kind: input, shape index: {}]
  %s3 = inlined_call_operand.vmem [shape: f32[4,4,320], index: 3, kind: input, shape index: {}]
  %s4 = inlined_call_operand.vmem [shape: f32[2,4,320], index: 4, kind: output, shape index: {0}]
  %s5 = inlined_call_operand.vmem [shape: f32[2,4,320], index: 5, kind: output, shape index: {1}]
  %6 = xla_tuple %s4, %s5
  %s7 = sld [smem:[#allocation0]]
  $region34: #{_lambda_.1} parent=0
    _
  %s9 = ssub.s32 1, %s7
  %s10 = scalar_select 0, %s9, %s7
  // Predicated region
  $region2: #{_lambda_.1} parent=0 // pred_check
    _
  $region3: #{_lambda_.1} parent=0 // pred_check_branch
    %12 = sbr.rel (0) target = $region5
  $region4: #{_lambda_.1} parent=0 // pred_region
    _
  $region5: #{_lambda_.1} parent=0 // pred_fallthru
    _
  // Predicated region
  $region6: #{_lambda_.1} parent=0 // pred_check
    _
  $region7: #{_lambda_.1} parent=0 // pred_check_branch
    %14 = sbr.rel (0) target = $region9
  $region8: #{_lambda_.1} parent=0 // pred_region
    _
  $region9: #{_lambda_.1} parent=0 // pred_fallthru
    _
  // Predicated region
  $region10: #{_lambda_.1} parent=0 // pred_check
    _
  $region11: #{_lambda_.1} parent=0 // pred_check_branch
    %16 = sbr.rel (0) target = $region13
  $region12: #{_lambda_.1} parent=0 // pred_region
    _
  $region13: #{_lambda_.1} parent=0 // pred_fallthru
    _
  // Predicated region
  $region14: #{_lambda_.1} parent=0 // pred_check
    _
  $region15: #{_lambda_.1} parent=0 // pred_check_branch
    %18 = sbr.rel (0) target = $region17
  $region16: #{_lambda_.1} parent=0 // pred_region
    _
  $region17: #{_lambda_.1} parent=0 // pred_fallthru
    _
  %v19 = vld [vmem:[%s0] ss:$4 sm:$0x7]
  %s20 = scalar_lea.vmem %s0, 12
  %v21 = vld [vmem:[%s20] ss:$4 sm:$0x7]
  %v22 = vld [vmem:[%s1] ss:$4 sm:$0x7]
  %s23 = scalar_lea.vmem %s1, 12
  %v24 = vld [vmem:[%s23] ss:$4 sm:$0x7]
  %v25 = vld [vmem:[%s2] sm:$0xff]
  %v26 = vld [vmem:[%s2 + $0x8] sm:$0xf]
  %v27 = vld [vmem:[%s3] sm:$0xff]
  %v28 = vld [vmem:[%s3 + $0x8] sm:$0xf]
  %v31 = vlaneseq
  %v32 = vshrl.u32 %v31, 7
  %v33 = vsub.s32 0, %v32
  %v34 = vrot.slane %v19, %v33
  %v35 = vlaneseq
  %v36 = vshrl.u32 %v35, 7
  %v37 = vsub.s32 1, %v36
  %v38 = vrot.slane %v19, %v37
  %v39 = vlaneseq
  %v40 = vshrl.u32 %v39, 7
  %v41 = vsub.s32 2, %v40
  %v42 = vrot.slane %v19, %v41
  %v43 = vlaneseq
  %v44 = vshrl.u32 %v43, 7
  %v45 = vsub.s32 0, %v44
  %v46 = vrot.slane %v21, %v45
  %v47 = vlaneseq
  %v48 = vshrl.u32 %v47, 7
  %v49 = vsub.s32 1, %v48
  %v50 = vrot.slane %v21, %v49
  %v51 = vlaneseq
  %v52 = vshrl.u32 %v51, 7
  %v53 = vsub.s32 2, %v52
  %v54 = vrot.slane %v21, %v53
  %v62 = vcombine.high %v25, %v25
  %v64 = vmul.f32 %v34, %v25
  %v65 = vmul.f32 %v38, %v62
  %v66 = vmul.f32 %v42, %v26
  %v67 = vmul.f32 %v46, %v25
  %v68 = vmul.f32 %v50, %v62
  %v69 = vmul.f32 %v54, %v26
  %v70 = vadd.f32 %v64, 0.0
  %v71 = vadd.f32 %v65, 0.0
  %v72 = vadd.f32 %v66, 0.0
  %v73 = vadd.f32 %v67, 0.0
  %v74 = vadd.f32 %v68, 0.0
  %v75 = vadd.f32 %v69, 0.0
  %v78 = vlaneseq
  %v79 = vshrl.u32 %v78, 7
  %v80 = vsub.s32 0, %v79
  %v81 = vrot.slane %v22, %v80
  %v82 = vlaneseq
  %v83 = vshrl.u32 %v82, 7
  %v84 = vsub.s32 1, %v83
  %v85 = vrot.slane %v22, %v84
  %v86 = vlaneseq
  %v87 = vshrl.u32 %v86, 7
  %v88 = vsub.s32 2, %v87
  %v89 = vrot.slane %v22, %v88
  %v90 = vlaneseq
  %v91 = vshrl.u32 %v90, 7
  %v92 = vsub.s32 0, %v91
  %v93 = vrot.slane %v24, %v92
  %v94 = vlaneseq
  %v95 = vshrl.u32 %v94, 7
  %v96 = vsub.s32 1, %v95
  %v97 = vrot.slane %v24, %v96
  %v98 = vlaneseq
  %v99 = vshrl.u32 %v98, 7
  %v100 = vsub.s32 2, %v99
  %v101 = vrot.slane %v24, %v100
  %v109 = vcombine.high %v27, %v27
  %v111 = vmul.f32 %v81, %v27
  %v112 = vmul.f32 %v85, %v109
  %v113 = vmul.f32 %v89, %v28
  %v114 = vmul.f32 %v93, %v27
  %v115 = vmul.f32 %v97, %v109
  %v116 = vmul.f32 %v101, %v28
  %v117 = vsub.f32 %v70, %v111
  %v118 = vsub.f32 %v71, %v112
  %v119 = vsub.f32 %v72, %v113
  %v120 = vsub.f32 %v73, %v114
  %v121 = vsub.f32 %v74, %v115
  %v122 = vsub.f32 %v75, %v116
  %v123 = vmul.f32 %v34, %v27
  %v124 = vmul.f32 %v38, %v109
  %v125 = vmul.f32 %v42, %v28
  %v126 = vmul.f32 %v46, %v27
  %v127 = vmul.f32 %v50, %v109
  %v128 = vmul.f32 %v54, %v28
  %v129 = vadd.f32 %v123, 0.0
  %v130 = vadd.f32 %v124, 0.0
  %v131 = vadd.f32 %v125, 0.0
  %v132 = vadd.f32 %v126, 0.0
  %v133 = vadd.f32 %v127, 0.0
  %v134 = vadd.f32 %v128, 0.0
  %v135 = vmul.f32 %v81, %v25
  %v136 = vmul.f32 %v85, %v62
  %v137 = vmul.f32 %v89, %v26
  %v138 = vmul.f32 %v93, %v25
  %v139 = vmul.f32 %v97, %v62
  %v140 = vmul.f32 %v101, %v26
  %v141 = vadd.f32 %v129, %v135
  %v142 = vadd.f32 %v130, %v136
  %v143 = vadd.f32 %v131, %v137
  %v144 = vadd.f32 %v132, %v138
  %v145 = vadd.f32 %v133, %v139
  %v146 = vadd.f32 %v134, %v140
  %s147 = scalar_lea.vmem %s0, 1
  %v148 = vld [vmem:[%s147] ss:$4 sm:$0x7]
  %s149 = scalar_lea.vmem %s0, 13
  %v150 = vld [vmem:[%s149] ss:$4 sm:$0x7]
  %s151 = scalar_lea.vmem %s1, 1
  %v152 = vld [vmem:[%s151] ss:$4 sm:$0x7]
  %s153 = scalar_lea.vmem %s1, 13
  %v154 = vld [vmem:[%s153] ss:$4 sm:$0x7]
  %s155 = scalar_lea.vmem %s2, 12
  %v156 = vld [vmem:[%s155] sm:$0xff]
  %v157 = vld [vmem:[%s155 + $0x8] sm:$0xf]
  %s158 = scalar_lea.vmem %s3, 12
  %v159 = vld [vmem:[%s158] sm:$0xff]
  %v160 = vld [vmem:[%s158 + $0x8] sm:$0xf]
  %v163 = vlaneseq
  %v164 = vshrl.u32 %v163, 7
  %v165 = vsub.s32 0, %v164
  %v166 = vrot.slane %v148, %v165
  %v167 = vlaneseq
  %v168 = vshrl.u32 %v167, 7
  %v169 = vsub.s32 1, %v168
  %v170 = vrot.slane %v148, %v169
  %v171 = vlaneseq
  %v172 = vshrl.u32 %v171, 7
  %v173 = vsub.s32 2, %v172
  %v174 = vrot.slane %v148, %v173
  %v175 = vlaneseq
  %v176 = vshrl.u32 %v175, 7
  %v177 = vsub.s32 0, %v176
  %v178 = vrot.slane %v150, %v177
  %v179 = vlaneseq
  %v180 = vshrl.u32 %v179, 7
  %v181 = vsub.s32 1, %v180
  %v182 = vrot.slane %v150, %v181
  %v183 = vlaneseq
  %v184 = vshrl.u32 %v183, 7
  %v185 = vsub.s32 2, %v184
  %v186 = vrot.slane %v150, %v185
  %v194 = vcombine.high %v156, %v156
  %v196 = vmul.f32 %v166, %v156
  %v197 = vmul.f32 %v170, %v194
  %v198 = vmul.f32 %v174, %v157
  %v199 = vmul.f32 %v178, %v156
  %v200 = vmul.f32 %v182, %v194
  %v201 = vmul.f32 %v186, %v157
  %v202 = vadd.f32 %v117, %v196
  %v203 = vadd.f32 %v118, %v197
  %v204 = vadd.f32 %v119, %v198
  %v205 = vadd.f32 %v120, %v199
  %v206 = vadd.f32 %v121, %v200
  %v207 = vadd.f32 %v122, %v201
  %v210 = vlaneseq
  %v211 = vshrl.u32 %v210, 7
  %v212 = vsub.s32 0, %v211
  %v213 = vrot.slane %v152, %v212
  %v214 = vlaneseq
  %v215 = vshrl.u32 %v214, 7
  %v216 = vsub.s32 1, %v215
  %v217 = vrot.slane %v152, %v216
  %v218 = vlaneseq
  %v219 = vshrl.u32 %v218, 7
  %v220 = vsub.s32 2, %v219
  %v221 = vrot.slane %v152, %v220
  %v222 = vlaneseq
  %v223 = vshrl.u32 %v222, 7
  %v224 = vsub.s32 0, %v223
  %v225 = vrot.slane %v154, %v224
  %v226 = vlaneseq
  %v227 = vshrl.u32 %v226, 7
  %v228 = vsub.s32 1, %v227
  %v229 = vrot.slane %v154, %v228
  %v230 = vlaneseq
  %v231 = vshrl.u32 %v230, 7
  %v232 = vsub.s32 2, %v231
  %v233 = vrot.slane %v154, %v232
  %v241 = vcombine.high %v159, %v159
  %v243 = vmul.f32 %v213, %v159
  %v244 = vmul.f32 %v217, %v241
  %v245 = vmul.f32 %v221, %v160
  %v246 = vmul.f32 %v225, %v159
  %v247 = vmul.f32 %v229, %v241
  %v248 = vmul.f32 %v233, %v160
  %v249 = vsub.f32 %v202, %v243
  %v250 = vsub.f32 %v203, %v244
  %v251 = vsub.f32 %v204, %v245
  %v252 = vsub.f32 %v205, %v246
  %v253 = vsub.f32 %v206, %v247
  %v254 = vsub.f32 %v207, %v248
  %v255 = vmul.f32 %v166, %v159
  %v256 = vmul.f32 %v170, %v241
  %v257 = vmul.f32 %v174, %v160
  %v258 = vmul.f32 %v178, %v159
  %v259 = vmul.f32 %v182, %v241
  %v260 = vmul.f32 %v186, %v160
  %v261 = vadd.f32 %v141, %v255
  %v262 = vadd.f32 %v142, %v256
  %v263 = vadd.f32 %v143, %v257
  %v264 = vadd.f32 %v144, %v258
  %v265 = vadd.f32 %v145, %v259
  %v266 = vadd.f32 %v146, %v260
  %v267 = vmul.f32 %v213, %v156
  %v268 = vmul.f32 %v217, %v194
  %v269 = vmul.f32 %v221, %v157
  %v270 = vmul.f32 %v225, %v156
  %v271 = vmul.f32 %v229, %v194
  %v272 = vmul.f32 %v233, %v157
  %v273 = vadd.f32 %v261, %v267
  %v274 = vadd.f32 %v262, %v268
  %v275 = vadd.f32 %v263, %v269
  %v276 = vadd.f32 %v264, %v270
  %v277 = vadd.f32 %v265, %v271
  %v278 = vadd.f32 %v266, %v272
  %s279 = scalar_lea.vmem %s0, 2
  %v280 = vld [vmem:[%s279] ss:$4 sm:$0x7]
  %s281 = scalar_lea.vmem %s0, 14
  %v282 = vld [vmem:[%s281] ss:$4 sm:$0x7]
  %s283 = scalar_lea.vmem %s1, 2
  %v284 = vld [vmem:[%s283] ss:$4 sm:$0x7]
  %s285 = scalar_lea.vmem %s1, 14
  %v286 = vld [vmem:[%s285] ss:$4 sm:$0x7]
  %s287 = scalar_lea.vmem %s2, 24
  %v288 = vld [vmem:[%s287] sm:$0xff]
  %v289 = vld [vmem:[%s287 + $0x8] sm:$0xf]
  %s290 = scalar_lea.vmem %s3, 24
  %v291 = vld [vmem:[%s290] sm:$0xff]
  %v292 = vld [vmem:[%s290 + $0x8] sm:$0xf]
  %v295 = vlaneseq
  %v296 = vshrl.u32 %v295, 7
  %v297 = vsub.s32 0, %v296
  %v298 = vrot.slane %v280, %v297
  %v299 = vlaneseq
  %v300 = vshrl.u32 %v299, 7
  %v301 = vsub.s32 1, %v300
  %v302 = vrot.slane %v280, %v301
  %v303 = vlaneseq
  %v304 = vshrl.u32 %v303, 7
  %v305 = vsub.s32 2, %v304
  %v306 = vrot.slane %v280, %v305
  %v307 = vlaneseq
  %v308 = vshrl.u32 %v307, 7
  %v309 = vsub.s32 0, %v308
  %v310 = vrot.slane %v282, %v309
  %v311 = vlaneseq
  %v312 = vshrl.u32 %v311, 7
  %v313 = vsub.s32 1, %v312
  %v314 = vrot.slane %v282, %v313
  %v315 = vlaneseq
  %v316 = vshrl.u32 %v315, 7
  %v317 = vsub.s32 2, %v316
  %v318 = vrot.slane %v282, %v317
  %v326 = vcombine.high %v288, %v288
  %v328 = vmul.f32 %v298, %v288
  %v329 = vmul.f32 %v302, %v326
  %v330 = vmul.f32 %v306, %v289
  %v331 = vmul.f32 %v310, %v288
  %v332 = vmul.f32 %v314, %v326
  %v333 = vmul.f32 %v318, %v289
  %v334 = vadd.f32 %v249, %v328
  %v335 = vadd.f32 %v250, %v329
  %v336 = vadd.f32 %v251, %v330
  %v337 = vadd.f32 %v252, %v331
  %v338 = vadd.f32 %v253, %v332
  %v339 = vadd.f32 %v254, %v333
  %v342 = vlaneseq
  %v343 = vshrl.u32 %v342, 7
  %v344 = vsub.s32 0, %v343
  %v345 = vrot.slane %v284, %v344
  %v346 = vlaneseq
  %v347 = vshrl.u32 %v346, 7
  %v348 = vsub.s32 1, %v347
  %v349 = vrot.slane %v284, %v348
  %v350 = vlaneseq
  %v351 = vshrl.u32 %v350, 7
  %v352 = vsub.s32 2, %v351
  %v353 = vrot.slane %v284, %v352
  %v354 = vlaneseq
  %v355 = vshrl.u32 %v354, 7
  %v356 = vsub.s32 0, %v355
  %v357 = vrot.slane %v286, %v356
  %v358 = vlaneseq
  %v359 = vshrl.u32 %v358, 7
  %v360 = vsub.s32 1, %v359
  %v361 = vrot.slane %v286, %v360
  %v362 = vlaneseq
  %v363 = vshrl.u32 %v362, 7
  %v364 = vsub.s32 2, %v363
  %v365 = vrot.slane %v286, %v364
  %v373 = vcombine.high %v291, %v291
  %v375 = vmul.f32 %v345, %v291
  %v376 = vmul.f32 %v349, %v373
  %v377 = vmul.f32 %v353, %v292
  %v378 = vmul.f32 %v357, %v291
  %v379 = vmul.f32 %v361, %v373
  %v380 = vmul.f32 %v365, %v292
  %v381 = vsub.f32 %v334, %v375
  %v382 = vsub.f32 %v335, %v376
  %v383 = vsub.f32 %v336, %v377
  %v384 = vsub.f32 %v337, %v378
  %v385 = vsub.f32 %v338, %v379
  %v386 = vsub.f32 %v339, %v380
  %v387 = vmul.f32 %v298, %v291
  %v388 = vmul.f32 %v302, %v373
  %v389 = vmul.f32 %v306, %v292
  %v390 = vmul.f32 %v310, %v291
  %v391 = vmul.f32 %v314, %v373
  %v392 = vmul.f32 %v318, %v292
  %v393 = vadd.f32 %v273, %v387
  %v394 = vadd.f32 %v274, %v388
  %v395 = vadd.f32 %v275, %v389
  %v396 = vadd.f32 %v276, %v390
  %v397 = vadd.f32 %v277, %v391
  %v398 = vadd.f32 %v278, %v392
  %v399 = vmul.f32 %v345, %v288
  %v400 = vmul.f32 %v349, %v326
  %v401 = vmul.f32 %v353, %v289
  %v402 = vmul.f32 %v357, %v288
  %v403 = vmul.f32 %v361, %v326
  %v404 = vmul.f32 %v365, %v289
  %v405 = vadd.f32 %v393, %v399
  %v406 = vadd.f32 %v394, %v400
  %v407 = vadd.f32 %v395, %v401
  %v408 = vadd.f32 %v396, %v402
  %v409 = vadd.f32 %v397, %v403
  %v410 = vadd.f32 %v398, %v404
  %s411 = scalar_lea.vmem %s0, 3
  %v412 = vld [vmem:[%s411] ss:$4 sm:$0x7]
  %s413 = scalar_lea.vmem %s0, 15
  %v414 = vld [vmem:[%s413] ss:$4 sm:$0x7]
  %s415 = scalar_lea.vmem %s1, 3
  %v416 = vld [vmem:[%s415] ss:$4 sm:$0x7]
  %s417 = scalar_lea.vmem %s1, 15
  %v418 = vld [vmem:[%s417] ss:$4 sm:$0x7]
  %s419 = scalar_lea.vmem %s2, 36
  %v420 = vld [vmem:[%s419] sm:$0xff]
  %v421 = vld [vmem:[%s419 + $0x8] sm:$0xf]
  %s422 = scalar_lea.vmem %s3, 36
  %v423 = vld [vmem:[%s422] sm:$0xff]
  %v424 = vld [vmem:[%s422 + $0x8] sm:$0xf]
  %v427 = vlaneseq
  %v428 = vshrl.u32 %v427, 7
  %v429 = vsub.s32 0, %v428
  %v430 = vrot.slane %v412, %v429
  %v431 = vlaneseq
  %v432 = vshrl.u32 %v431, 7
  %v433 = vsub.s32 1, %v432
  %v434 = vrot.slane %v412, %v433
  %v435 = vlaneseq
  %v436 = vshrl.u32 %v435, 7
  %v437 = vsub.s32 2, %v436
  %v438 = vrot.slane %v412, %v437
  %v439 = vlaneseq
  %v440 = vshrl.u32 %v439, 7
  %v441 = vsub.s32 0, %v440
  %v442 = vrot.slane %v414, %v441
  %v443 = vlaneseq
  %v444 = vshrl.u32 %v443, 7
  %v445 = vsub.s32 1, %v444
  %v446 = vrot.slane %v414, %v445
  %v447 = vlaneseq
  %v448 = vshrl.u32 %v447, 7
  %v449 = vsub.s32 2, %v448
  %v450 = vrot.slane %v414, %v449
  %v458 = vcombine.high %v420, %v420
  %v460 = vmul.f32 %v430, %v420
  %v461 = vmul.f32 %v434, %v458
  %v462 = vmul.f32 %v438, %v421
  %v463 = vmul.f32 %v442, %v420
  %v464 = vmul.f32 %v446, %v458
  %v465 = vmul.f32 %v450, %v421
  %v466 = vadd.f32 %v381, %v460
  %v467 = vadd.f32 %v382, %v461
  %v468 = vadd.f32 %v383, %v462
  %v469 = vadd.f32 %v384, %v463
  %v470 = vadd.f32 %v385, %v464
  %v471 = vadd.f32 %v386, %v465
  %v474 = vlaneseq
  %v475 = vshrl.u32 %v474, 7
  %v476 = vsub.s32 0, %v475
  %v477 = vrot.slane %v416, %v476
  %v478 = vlaneseq
  %v479 = vshrl.u32 %v478, 7
  %v480 = vsub.s32 1, %v479
  %v481 = vrot.slane %v416, %v480
  %v482 = vlaneseq
  %v483 = vshrl.u32 %v482, 7
  %v484 = vsub.s32 2, %v483
  %v485 = vrot.slane %v416, %v484
  %v486 = vlaneseq
  %v487 = vshrl.u32 %v486, 7
  %v488 = vsub.s32 0, %v487
  %v489 = vrot.slane %v418, %v488
  %v490 = vlaneseq
  %v491 = vshrl.u32 %v490, 7
  %v492 = vsub.s32 1, %v491
  %v493 = vrot.slane %v418, %v492
  %v494 = vlaneseq
  %v495 = vshrl.u32 %v494, 7
  %v496 = vsub.s32 2, %v495
  %v497 = vrot.slane %v418, %v496
  %v505 = vcombine.high %v423, %v423
  %v507 = vmul.f32 %v477, %v423
  %v508 = vmul.f32 %v481, %v505
  %v509 = vmul.f32 %v485, %v424
  %v510 = vmul.f32 %v489, %v423
  %v511 = vmul.f32 %v493, %v505
  %v512 = vmul.f32 %v497, %v424
  %v513 = vsub.f32 %v466, %v507
  %v514 = vsub.f32 %v467, %v508
  %v515 = vsub.f32 %v468, %v509
  %v516 = vsub.f32 %v469, %v510
  %v517 = vsub.f32 %v470, %v511
  %v518 = vsub.f32 %v471, %v512
  %v519 = vmul.f32 %v430, %v423
  %v520 = vmul.f32 %v434, %v505
  %v521 = vmul.f32 %v438, %v424
  %v522 = vmul.f32 %v442, %v423
  %v523 = vmul.f32 %v446, %v505
  %v524 = vmul.f32 %v450, %v424
  %v525 = vadd.f32 %v405, %v519
  %v526 = vadd.f32 %v406, %v520
  %v527 = vadd.f32 %v407, %v521
  %v528 = vadd.f32 %v408, %v522
  %v529 = vadd.f32 %v409, %v523
  %v530 = vadd.f32 %v410, %v524
  %v531 = vmul.f32 %v477, %v420
  %v532 = vmul.f32 %v481, %v458
  %v533 = vmul.f32 %v485, %v421
  %v534 = vmul.f32 %v489, %v420
  %v535 = vmul.f32 %v493, %v458
  %v536 = vmul.f32 %v497, %v421
  %v537 = vadd.f32 %v525, %v531
  %v538 = vadd.f32 %v526, %v532
  %v539 = vadd.f32 %v527, %v533
  %v540 = vadd.f32 %v528, %v534
  %v541 = vadd.f32 %v529, %v535
  %v542 = vadd.f32 %v530, %v536
  %v547 = vcombine.low %v513, %v514
  %v548 = vcombine.low %v516, %v517
  %551 = vst [vmem:[%s4] sm:$0xff] %v547
  %vm552 = vcmask 519168
  %553 = vst.msk [vmem:[%s4 + $0x8] sm:$0xf] %vm552, %v515
  %554 = vst [vmem:[%s4 + $0xc] sm:$0xff] %v548
  %555 = vst.msk [vmem:[%s4 + $0x14] sm:$0xf] %vm552, %v518
  %v560 = vcombine.low %v537, %v538
  %v561 = vcombine.low %v540, %v541
  %564 = vst [vmem:[%s5] sm:$0xff] %v560
  %565 = vst.msk [vmem:[%s5 + $0x8] sm:$0xf] %vm552, %v539
  %566 = vst [vmem:[%s5 + $0xc] sm:$0xff] %v561
  %567 = vst.msk [vmem:[%s5 + $0x14] sm:$0xf] %vm552, %v542
  // Predicated region
  $region18: #{_lambda_.1} parent=0 // pred_check
    _
  $region19: #{_lambda_.1} parent=0 // pred_check_branch
    %569 = sbr.rel (0) target = $region21
  $region20: #{_lambda_.1} parent=0 // pred_region
    _
  $region21: #{_lambda_.1} parent=0 // pred_fallthru
    _
  // Predicated region
  $region22: #{_lambda_.1} parent=0 // pred_check
    _
  $region23: #{_lambda_.1} parent=0 // pred_check_branch
    %571 = sbr.rel (0) target = $region25
  $region24: #{_lambda_.1} parent=0 // pred_region
    _
  $region25: #{_lambda_.1} parent=0 // pred_fallthru
    _
  // Predicated region
  $region26: #{_lambda_.1} parent=0 // pred_check
    _
  $region27: #{_lambda_.1} parent=0 // pred_check_branch
    %573 = sbr.rel (0) target = $region29
  $region28: #{_lambda_.1} parent=0 // pred_region
    _
  $region29: #{_lambda_.1} parent=0 // pred_fallthru
    _
  // Predicated region
  $region30: #{_lambda_.1} parent=0 // pred_check
    _
  $region31: #{_lambda_.1} parent=0 // pred_check_branch
    %575 = sbr.rel (0) target = $region33
  $region32: #{_lambda_.1} parent=0 // pred_region
    _
  $region33: #{_lambda_.1} parent=0 // pred_fallthru
    _

// kernel: reverse.1
$region0: #{reverse.1}
  #allocation0 [shape = 's32[1]{0}', space=sflag, size = 0x4, scoped, tag = 'scoped memory for reverse.1']
  %s0 = inlined_call_operand.vmem [shape: f32[2,4,16,16,7], index: 0, kind: input, shape index: {}]
  %s1 = inlined_call_operand.vmem [shape: f32[2,4,16,16,7], index: 1, kind: output, shape index: {}]
  %s2 = scalar_lea.vmem %s0, 96
  %v3 = vld [vmem:[%s2] sm:$0xff]
  %4 = vst [vmem:[%s1] sm:$0xff] %v3
  %s5 = scalar_lea.vmem %s0, 544
  %v6 = vld [vmem:[%s5] sm:$0xff]
  %s7 = scalar_lea.vmem %s1, 448
  %8 = vst [vmem:[%s7] sm:$0xff] %v6
  %s9 = scalar_lea.vmem %s0, 208
  %v10 = vld [vmem:[%s9] sm:$0xff]
  %s11 = scalar_lea.vmem %s1, 112
  %12 = vst [vmem:[%s11] sm:$0xff] %v10
  %s13 = scalar_lea.vmem %s0, 656
  %v14 = vld [vmem:[%s13] sm:$0xff]
  %s15 = scalar_lea.vmem %s1, 560
  %16 = vst [vmem:[%s15] sm:$0xff] %v14
  %s17 = scalar_lea.vmem %s0, 320
  %v18 = vld [vmem:[%s17] sm:$0xff]
  %s19 = scalar_lea.vmem %s1, 224
  %20 = vst [vmem:[%s19] sm:$0xff] %v18
  %s21 = scalar_lea.vmem %s0, 768
  %v22 = vld [vmem:[%s21] sm:$0xff]
  %s23 = scalar_lea.vmem %s1, 672
  %24 = vst [vmem:[%s23] sm:$0xff] %v22
  %s25 = scalar_lea.vmem %s0, 432
  %v26 = vld [vmem:[%s25] sm:$0xff]
  %s27 = scalar_lea.vmem %s1, 336
  %28 = vst [vmem:[%s27] sm:$0xff] %v26
  %s29 = scalar_lea.vmem %s0, 880
  %v30 = vld [vmem:[%s29] sm:$0xff]
  %s31 = scalar_lea.vmem %s1, 784
  %32 = vst [vmem:[%s31] sm:$0xff] %v30
  %s33 = scalar_lea.vmem %s0, 80
  %v34 = vld [vmem:[%s33] sm:$0xff]
  %s35 = scalar_lea.vmem %s1, 16
  %36 = vst [vmem:[%s35] sm:$0xff] %v34
  %s37 = scalar_lea.vmem %s0, 528
  %v38 = vld [vmem:[%s37] sm:$0xff]
  %s39 = scalar_lea.vmem %s1, 464
  %40 = vst [vmem:[%s39] sm:$0xff] %v38
  %s41 = scalar_lea.vmem %s0, 192
  %v42 = vld [vmem:[%s41] sm:$0xff]
  %s43 = scalar_lea.vmem %s1, 128
  %44 = vst [vmem:[%s43] sm:$0xff] %v42
  %s45 = scalar_lea.vmem %s0, 640
  %v46 = vld [vmem:[%s45] sm:$0xff]
  %s47 = scalar_lea.vmem %s1, 576
  %48 = vst [vmem:[%s47] sm:$0xff] %v46
  %s49 = scalar_lea.vmem %s0, 304
  %v50 = vld [vmem:[%s49] sm:$0xff]
  %s51 = scalar_lea.vmem %s1, 240
  %52 = vst [vmem:[%s51] sm:$0xff] %v50
  %s53 = scalar_lea.vmem %s0, 752
  %v54 = vld [vmem:[%s53] sm:$0xff]
  %s55 = scalar_lea.vmem %s1, 688
  %56 = vst [vmem:[%s55] sm:$0xff] %v54
  %s57 = scalar_lea.vmem %s0, 416
  %v58 = vld [vmem:[%s57] sm:$0xff]
  %s59 = scalar_lea.vmem %s1, 352
  %60 = vst [vmem:[%s59] sm:$0xff] %v58
  %s61 = scalar_lea.vmem %s0, 864
  %v62 = vld [vmem:[%s61] sm:$0xff]
  %s63 = scalar_lea.vmem %s1, 800
  %64 = vst [vmem:[%s63] sm:$0xff] %v62
  %s65 = scalar_lea.vmem %s0, 64
  %v66 = vld [vmem:[%s65] sm:$0xff]
  %s67 = scalar_lea.vmem %s1, 32
  %68 = vst [vmem:[%s67] sm:$0xff] %v66
  %s69 = scalar_lea.vmem %s0, 512
  %v70 = vld [vmem:[%s69] sm:$0xff]
  %s71 = scalar_lea.vmem %s1, 480
  %72 = vst [vmem:[%s71] sm:$0xff] %v70
  %s73 = scalar_lea.vmem %s0, 176
  %v74 = vld [vmem:[%s73] sm:$0xff]
  %s75 = scalar_lea.vmem %s1, 144
  %76 = vst [vmem:[%s75] sm:$0xff] %v74
  %s77 = scalar_lea.vmem %s0, 624
  %v78 = vld [vmem:[%s77] sm:$0xff]
  %s79 = scalar_lea.vmem %s1, 592
  %80 = vst [vmem:[%s79] sm:$0xff] %v78
  %s81 = scalar_lea.vmem %s0, 288
  %v82 = vld [vmem:[%s81] sm:$0xff]
  %s83 = scalar_lea.vmem %s1, 256
  %84 = vst [vmem:[%s83] sm:$0xff] %v82
  %s85 = scalar_lea.vmem %s0, 736
  %v86 = vld [vmem:[%s85] sm:$0xff]
  %s87 = scalar_lea.vmem %s1, 704
  %88 = vst [vmem:[%s87] sm:$0xff] %v86
  %s89 = scalar_lea.vmem %s0, 400
  %v90 = vld [vmem:[%s89] sm:$0xff]
  %s91 = scalar_lea.vmem %s1, 368
  %92 = vst [vmem:[%s91] sm:$0xff] %v90
  %s93 = scalar_lea.vmem %s0, 848
  %v94 = vld [vmem:[%s93] sm:$0xff]
  %s95 = scalar_lea.vmem %s1, 816
  %96 = vst [vmem:[%s95] sm:$0xff] %v94
  %s97 = scalar_lea.vmem %s0, 48
  %v98 = vld [vmem:[%s97] sm:$0xff]
  %s99 = scalar_lea.vmem %s1, 48
  %100 = vst [vmem:[%s99] sm:$0xff] %v98
  %s101 = scalar_lea.vmem %s0, 496
  %v102 = vld [vmem:[%s101] sm:$0xff]
  %s103 = scalar_lea.vmem %s1, 496
  %104 = vst [vmem:[%s103] sm:$0xff] %v102
  %s105 = scalar_lea.vmem %s0, 160
  %v106 = vld [vmem:[%s105] sm:$0xff]
  %s107 = scalar_lea.vmem %s1, 160
  %108 = vst [vmem:[%s107] sm:$0xff] %v106
  %s109 = scalar_lea.vmem %s0, 608
  %v110 = vld [vmem:[%s109] sm:$0xff]
  %s111 = scalar_lea.vmem %s1, 608
  %112 = vst [vmem:[%s111] sm:$0xff] %v110
  %s113 = scalar_lea.vmem %s0, 272
  %v114 = vld [vmem:[%s113] sm:$0xff]
  %s115 = scalar_lea.vmem %s1, 272
  %116 = vst [vmem:[%s115] sm:$0xff] %v114
  %s117 = scalar_lea.vmem %s0, 720
  %v118 = vld [vmem:[%s117] sm:$0xff]
  %s119 = scalar_lea.vmem %s1, 720
  %120 = vst [vmem:[%s119] sm:$0xff] %v118
  %s121 = scalar_lea.vmem %s0, 384
  %v122 = vld [vmem:[%s121] sm:$0xff]
  %s123 = scalar_lea.vmem %s1, 384
  %124 = vst [vmem:[%s123] sm:$0xff] %v122
  %s125 = scalar_lea.vmem %s0, 832
  %v126 = vld [vmem:[%s125] sm:$0xff]
  %s127 = scalar_lea.vmem %s1, 832
  %128 = vst [vmem:[%s127] sm:$0xff] %v126
  %s129 = scalar_lea.vmem %s0, 32
  %v130 = vld [vmem:[%s129] sm:$0xff]
  %s131 = scalar_lea.vmem %s1, 64
  %132 = vst [vmem:[%s131] sm:$0xff] %v130
  %s133 = scalar_lea.vmem %s0, 480
  %v134 = vld [vmem:[%s133] sm:$0xff]
  %s135 = scalar_lea.vmem %s1, 512
  %136 = vst [vmem:[%s135] sm:$0xff] %v134
  %s137 = scalar_lea.vmem %s0, 144
  %v138 = vld [vmem:[%s137] sm:$0xff]
  %s139 = scalar_lea.vmem %s1, 176
  %140 = vst [vmem:[%s139] sm:$0xff] %v138
  %s141 = scalar_lea.vmem %s0, 592
  %v142 = vld [vmem:[%s141] sm:$0xff]
  %s143 = scalar_lea.vmem %s1, 624
  %144 = vst [vmem:[%s143] sm:$0xff] %v142
  %s145 = scalar_lea.vmem %s0, 256
  %v146 = vld [vmem:[%s145] sm:$0xff]
  %s147 = scalar_lea.vmem %s1, 288
  %148 = vst [vmem:[%s147] sm:$0xff] %v146
  %s149 = scalar_lea.vmem %s0, 704
  %v150 = vld [vmem:[%s149] sm:$0xff]
  %s151 = scalar_lea.vmem %s1, 736
  %152 = vst [vmem:[%s151] sm:$0xff] %v150
  %s153 = scalar_lea.vmem %s0, 368
  %v154 = vld [vmem:[%s153] sm:$0xff]
  %s155 = scalar_lea.vmem %s1, 400
  %156 = vst [vmem:[%s155] sm:$0xff] %v154
  %s157 = scalar_lea.vmem %s0, 816
  %v158 = vld [vmem:[%s157] sm:$0xff]
  %s159 = scalar_lea.vmem %s1, 848
  %160 = vst [vmem:[%s159] sm:$0xff] %v158
  %s161 = scalar_lea.vmem %s0, 16
  %v162 = vld [vmem:[%s161] sm:$0xff]
  %s163 = scalar_lea.vmem %s1, 80
  %164 = vst [vmem:[%s163] sm:$0xff] %v162
  %s165 = scalar_lea.vmem %s0, 464
  %v166 = vld [vmem:[%s165] sm:$0xff]
  %s167 = scalar_lea.vmem %s1, 528
  %168 = vst [vmem:[%s167] sm:$0xff] %v166
  %s169 = scalar_lea.vmem %s0, 128
  %v170 = vld [vmem:[%s169] sm:$0xff]
  %s171 = scalar_lea.vmem %s1, 192
  %172 = vst [vmem:[%s171] sm:$0xff] %v170
  %s173 = scalar_lea.vmem %s0, 576
  %v174 = vld [vmem:[%s173] sm:$0xff]
  %s175 = scalar_lea.vmem %s1, 640
  %176 = vst [vmem:[%s175] sm:$0xff] %v174
  %s177 = scalar_lea.vmem %s0, 240
  %v178 = vld [vmem:[%s177] sm:$0xff]
  %s179 = scalar_lea.vmem %s1, 304
  %180 = vst [vmem:[%s179] sm:$0xff] %v178
  %s181 = scalar_lea.vmem %s0, 688
  %v182 = vld [vmem:[%s181] sm:$0xff]
  %s183 = scalar_lea.vmem %s1, 752
  %184 = vst [vmem:[%s183] sm:$0xff] %v182
  %s185 = scalar_lea.vmem %s0, 352
  %v186 = vld [vmem:[%s185] sm:$0xff]
  %s187 = scalar_lea.vmem %s1, 416
  %188 = vst [vmem:[%s187] sm:$0xff] %v186
  %s189 = scalar_lea.vmem %s0, 800
  %v190 = vld [vmem:[%s189] sm:$0xff]
  %s191 = scalar_lea.vmem %s1, 864
  %192 = vst [vmem:[%s191] sm:$0xff] %v190
  %v193 = vld [vmem:[%s0] sm:$0xff]
  %s194 = scalar_lea.vmem %s1, 96
  %195 = vst [vmem:[%s194] sm:$0xff] %v193
  %s196 = scalar_lea.vmem %s0, 448
  %v197 = vld [vmem:[%s196] sm:$0xff]
  %s198 = scalar_lea.vmem %s1, 544
  %199 = vst [vmem:[%s198] sm:$0xff] %v197
  %s200 = scalar_lea.vmem %s0, 112
  %v201 = vld [vmem:[%s200] sm:$0xff]
  %s202 = scalar_lea.vmem %s1, 208
  %203 = vst [vmem:[%s202] sm:$0xff] %v201
  %s204 = scalar_lea.vmem %s0, 560
  %v205 = vld [vmem:[%s204] sm:$0xff]
  %s206 = scalar_lea.vmem %s1, 656
  %207 = vst [vmem:[%s206] sm:$0xff] %v205
  %s208 = scalar_lea.vmem %s0, 224
  %v209 = vld [vmem:[%s208] sm:$0xff]
  %s210 = scalar_lea.vmem %s1, 320
  %211 = vst [vmem:[%s210] sm:$0xff] %v209
  %s212 = scalar_lea.vmem %s0, 672
  %v213 = vld [vmem:[%s212] sm:$0xff]
  %s214 = scalar_lea.vmem %s1, 768
  %215 = vst [vmem:[%s214] sm:$0xff] %v213
  %s216 = scalar_lea.vmem %s0, 336
  %v217 = vld [vmem:[%s216] sm:$0xff]
  %s218 = scalar_lea.vmem %s1, 432
  %219 = vst [vmem:[%s218] sm:$0xff] %v217
  %s220 = scalar_lea.vmem %s0, 784
  %v221 = vld [vmem:[%s220] sm:$0xff]
  %s222 = scalar_lea.vmem %s1, 880
  %223 = vst [vmem:[%s222] sm:$0xff] %v221
  %s224 = scalar_lea.vmem %s0, 104
  %v225 = vld [vmem:[%s224] sm:$0xff]
  %s226 = scalar_lea.vmem %s1, 8
  %227 = vst [vmem:[%s226] sm:$0xff] %v225
  %s228 = scalar_lea.vmem %s0, 552
  %v229 = vld [vmem:[%s228] sm:$0xff]
  %s230 = scalar_lea.vmem %s1, 456
  %231 = vst [vmem:[%s230] sm:$0xff] %v229
  %s232 = scalar_lea.vmem %s0, 216
  %v233 = vld [vmem:[%s232] sm:$0xff]
  %s234 = scalar_lea.vmem %s1, 120
  %235 = vst [vmem:[%s234] sm:$0xff] %v233
  %s236 = scalar_lea.vmem %s0, 664
  %v237 = vld [vmem:[%s236] sm:$0xff]
  %s238 = scalar_lea.vmem %s1, 568
  %239 = vst [vmem:[%s238] sm:$0xff] %v237
  %s240 = scalar_lea.vmem %s0, 328
  %v241 = vld [vmem:[%s240] sm:$0xff]
  %s242 = scalar_lea.vmem %s1, 232
  %243 = vst [vmem:[%s242] sm:$0xff] %v241
  %s244 = scalar_lea.vmem %s0, 776
  %v245 = vld [vmem:[%s244] sm:$0xff]
  %s246 = scalar_lea.vmem %s1, 680
  %247 = vst [vmem:[%s246] sm:$0xff] %v245
  %s248 = scalar_lea.vmem %s0, 440
  %v249 = vld [vmem:[%s248] sm:$0xff]
  %s250 = scalar_lea.vmem %s1, 344
  %251 = vst [vmem:[%s250] sm:$0xff] %v249
  %s252 = scalar_lea.vmem %s0, 888
  %v253 = vld [vmem:[%s252] sm:$0xff]
  %s254 = scalar_lea.vmem %s1, 792
  %255 = vst [vmem:[%s254] sm:$0xff] %v253
  %s256 = scalar_lea.vmem %s0, 88
  %v257 = vld [vmem:[%s256] sm:$0xff]
  %s258 = scalar_lea.vmem %s1, 24
  %259 = vst [vmem:[%s258] sm:$0xff] %v257
  %s260 = scalar_lea.vmem %s0, 536
  %v261 = vld [vmem:[%s260] sm:$0xff]
  %s262 = scalar_lea.vmem %s1, 472
  %263 = vst [vmem:[%s262] sm:$0xff] %v261
  %s264 = scalar_lea.vmem %s0, 200
  %v265 = vld [vmem:[%s264] sm:$0xff]
  %s266 = scalar_lea.vmem %s1, 136
  %267 = vst [vmem:[%s266] sm:$0xff] %v265
  %s268 = scalar_lea.vmem %s0, 648
  %v269 = vld [vmem:[%s268] sm:$0xff]
  %s270 = scalar_lea.vmem %s1, 584
  %271 = vst [vmem:[%s270] sm:$0xff] %v269
  %s272 = scalar_lea.vmem %s0, 312
  %v273 = vld [vmem:[%s272] sm:$0xff]
  %s274 = scalar_lea.vmem %s1, 248
  %275 = vst [vmem:[%s274] sm:$0xff] %v273
  %s276 = scalar_lea.vmem %s0, 760
  %v277 = vld [vmem:[%s276] sm:$0xff]
  %s278 = scalar_lea.vmem %s1, 696
  %279 = vst [vmem:[%s278] sm:$0xff] %v277
  %s280 = scalar_lea.vmem %s0, 424
  %v281 = vld [vmem:[%s280] sm:$0xff]
  %s282 = scalar_lea.vmem %s1, 360
  %283 = vst [vmem:[%s282] sm:$0xff] %v281
  %s284 = scalar_lea.vmem %s0, 872
  %v285 = vld [vmem:[%s284] sm:$0xff]
  %s286 = scalar_lea.vmem %s1, 808
  %287 = vst [vmem:[%s286] sm:$0xff] %v285
  %s288 = scalar_lea.vmem %s0, 72
  %v289 = vld [vmem:[%s288] sm:$0xff]
  %s290 = scalar_lea.vmem %s1, 40
  %291 = vst [vmem:[%s290] sm:$0xff] %v289
  %s292 = scalar_lea.vmem %s0, 520
  %v293 = vld [vmem:[%s292] sm:$0xff]
  %s294 = scalar_lea.vmem %s1, 488
  %295 = vst [vmem:[%s294] sm:$0xff] %v293
  %s296 = scalar_lea.vmem %s0, 184
  %v297 = vld [vmem:[%s296] sm:$0xff]
  %s298 = scalar_lea.vmem %s1, 152
  %299 = vst [vmem:[%s298] sm:$0xff] %v297
  %s300 = scalar_lea.vmem %s0, 632
  %v301 = vld [vmem:[%s300] sm:$0xff]
  %s302 = scalar_lea.vmem %s1, 600
  %303 = vst [vmem:[%s302] sm:$0xff] %v301
  %s304 = scalar_lea.vmem %s0, 296
  %v305 = vld [vmem:[%s304] sm:$0xff]
  %s306 = scalar_lea.vmem %s1, 264
  %307 = vst [vmem:[%s306] sm:$0xff] %v305
  %s308 = scalar_lea.vmem %s0, 744
  %v309 = vld [vmem:[%s308] sm:$0xff]
  %s310 = scalar_lea.vmem %s1, 712
  %311 = vst [vmem:[%s310] sm:$0xff] %v309
  %s312 = scalar_lea.vmem %s0, 408
  %v313 = vld [vmem:[%s312] sm:$0xff]
  %s314 = scalar_lea.vmem %s1, 376
  %315 = vst [vmem:[%s314] sm:$0xff] %v313
  %s316 = scalar_lea.vmem %s0, 856
  %v317 = vld [vmem:[%s316] sm:$0xff]
  %s318 = scalar_lea.vmem %s1, 824
  %319 = vst [vmem:[%s318] sm:$0xff] %v317
  %s320 = scalar_lea.vmem %s0, 56
  %v321 = vld [vmem:[%s320] sm:$0xff]
  %s322 = scalar_lea.vmem %s1, 56
  %323 = vst [vmem:[%s322] sm:$0xff] %v321
  %s324 = scalar_lea.vmem %s0, 504
  %v325 = vld [vmem:[%s324] sm:$0xff]
  %s326 = scalar_lea.vmem %s1, 504
  %327 = vst [vmem:[%s326] sm:$0xff] %v325
  %s328 = scalar_lea.vmem %s0, 168
  %v329 = vld [vmem:[%s328] sm:$0xff]
  %s330 = scalar_lea.vmem %s1, 168
  %331 = vst [vmem:[%s330] sm:$0xff] %v329
  %s332 = scalar_lea.vmem %s0, 616
  %v333 = vld [vmem:[%s332] sm:$0xff]
  %s334 = scalar_lea.vmem %s1, 616
  %335 = vst [vmem:[%s334] sm:$0xff] %v333
  %s336 = scalar_lea.vmem %s0, 280
  %v337 = vld [vmem:[%s336] sm:$0xff]
  %s338 = scalar_lea.vmem %s1, 280
  %339 = vst [vmem:[%s338] sm:$0xff] %v337
  %s340 = scalar_lea.vmem %s0, 728
  %v341 = vld [vmem:[%s340] sm:$0xff]
  %s342 = scalar_lea.vmem %s1, 728
  %343 = vst [vmem:[%s342] sm:$0xff] %v341
  %s344 = scalar_lea.vmem %s0, 392
  %v345 = vld [vmem:[%s344] sm:$0xff]
  %s346 = scalar_lea.vmem %s1, 392
  %347 = vst [vmem:[%s346] sm:$0xff] %v345
  %s348 = scalar_lea.vmem %s0, 840
  %v349 = vld [vmem:[%s348] sm:$0xff]
  %s350 = scalar_lea.vmem %s1, 840
  %351 = vst [vmem:[%s350] sm:$0xff] %v349
  %s352 = scalar_lea.vmem %s0, 40
  %v353 = vld [vmem:[%s352] sm:$0xff]
  %s354 = scalar_lea.vmem %s1, 72
  %355 = vst [vmem:[%s354] sm:$0xff] %v353
  %s356 = scalar_lea.vmem %s0, 488
  %v357 = vld [vmem:[%s356] sm:$0xff]
  %s358 = scalar_lea.vmem %s1, 520
  %359 = vst [vmem:[%s358] sm:$0xff] %v357
  %s360 = scalar_lea.vmem %s0, 152
  %v361 = vld [vmem:[%s360] sm:$0xff]
  %s362 = scalar_lea.vmem %s1, 184
  %363 = vst [vmem:[%s362] sm:$0xff] %v361
  %s364 = scalar_lea.vmem %s0, 600
  %v365 = vld [vmem:[%s364] sm:$0xff]
  %s366 = scalar_lea.vmem %s1, 632
  %367 = vst [vmem:[%s366] sm:$0xff] %v365
  %s368 = scalar_lea.vmem %s0, 264
  %v369 = vld [vmem:[%s368] sm:$0xff]
  %s370 = scalar_lea.vmem %s1, 296
  %371 = vst [vmem:[%s370] sm:$0xff] %v369
  %s372 = scalar_lea.vmem %s0, 712
  %v373 = vld [vmem:[%s372] sm:$0xff]
  %s374 = scalar_lea.vmem %s1, 744
  %375 = vst [vmem:[%s374] sm:$0xff] %v373
  %s376 = scalar_lea.vmem %s0, 376
  %v377 = vld [vmem:[%s376] sm:$0xff]
  %s378 = scalar_lea.vmem %s1, 408
  %379 = vst [vmem:[%s378] sm:$0xff] %v377
  %s380 = scalar_lea.vmem %s0, 824
  %v381 = vld [vmem:[%s380] sm:$0xff]
  %s382 = scalar_lea.vmem %s1, 856
  %383 = vst [vmem:[%s382] sm:$0xff] %v381
  %s384 = scalar_lea.vmem %s0, 24
  %v385 = vld [vmem:[%s384] sm:$0xff]
  %s386 = scalar_lea.vmem %s1, 88
  %387 = vst [vmem:[%s386] sm:$0xff] %v385
  %s388 = scalar_lea.vmem %s0, 472
  %v389 = vld [vmem:[%s388] sm:$0xff]
  %s390 = scalar_lea.vmem %s1, 536
  %391 = vst [vmem:[%s390] sm:$0xff] %v389
  %s392 = scalar_lea.vmem %s0, 136
  %v393 = vld [vmem:[%s392] sm:$0xff]
  %s394 = scalar_lea.vmem %s1, 200
  %395 = vst [vmem:[%s394] sm:$0xff] %v393
  %s396 = scalar_lea.vmem %s0, 584
  %v397 = vld [vmem:[%s396] sm:$0xff]
  %s398 = scalar_lea.vmem %s1, 648
  %399 = vst [vmem:[%s398] sm:$0xff] %v397
  %s400 = scalar_lea.vmem %s0, 248
  %v401 = vld [vmem:[%s400] sm:$0xff]
  %s402 = scalar_lea.vmem %s1, 312
  %403 = vst [vmem:[%s402] sm:$0xff] %v401
  %s404 = scalar_lea.vmem %s0, 696
  %v405 = vld [vmem:[%s404] sm:$0xff]
  %s406 = scalar_lea.vmem %s1, 760
  %407 = vst [vmem:[%s406] sm:$0xff] %v405
  %s408 = scalar_lea.vmem %s0, 360
  %v409 = vld [vmem:[%s408] sm:$0xff]
  %s410 = scalar_lea.vmem %s1, 424
  %411 = vst [vmem:[%s410] sm:$0xff] %v409
  %s412 = scalar_lea.vmem %s0, 808
  %v413 = vld [vmem:[%s412] sm:$0xff]
  %s414 = scalar_lea.vmem %s1, 872
  %415 = vst [vmem:[%s414] sm:$0xff] %v413
  %s416 = scalar_lea.vmem %s0, 8
  %v417 = vld [vmem:[%s416] sm:$0xff]
  %s418 = scalar_lea.vmem %s1, 104
  %419 = vst [vmem:[%s418] sm:$0xff] %v417
  %s420 = scalar_lea.vmem %s0, 456
  %v421 = vld [vmem:[%s420] sm:$0xff]
  %s422 = scalar_lea.vmem %s1, 552
  %423 = vst [vmem:[%s422] sm:$0xff] %v421
  %s424 = scalar_lea.vmem %s0, 120
  %v425 = vld [vmem:[%s424] sm:$0xff]
  %s426 = scalar_lea.vmem %s1, 216
  %427 = vst [vmem:[%s426] sm:$0xff] %v425
  %s428 = scalar_lea.vmem %s0, 568
  %v429 = vld [vmem:[%s428] sm:$0xff]
  %s430 = scalar_lea.vmem %s1, 664
  %431 = vst [vmem:[%s430] sm:$0xff] %v429
  %s432 = scalar_lea.vmem %s0, 232
  %v433 = vld [vmem:[%s432] sm:$0xff]
  %s434 = scalar_lea.vmem %s1, 328
  %435 = vst [vmem:[%s434] sm:$0xff] %v433
  %s436 = scalar_lea.vmem %s0, 680
  %v437 = vld [vmem:[%s436] sm:$0xff]
  %s438 = scalar_lea.vmem %s1, 776
  %439 = vst [vmem:[%s438] sm:$0xff] %v437
  %s440 = scalar_lea.vmem %s0, 344
  %v441 = vld [vmem:[%s440] sm:$0xff]
  %s442 = scalar_lea.vmem %s1, 440
  %443 = vst [vmem:[%s442] sm:$0xff] %v441
  %s444 = scalar_lea.vmem %s0, 792
  %v445 = vld [vmem:[%s444] sm:$0xff]
  %s446 = scalar_lea.vmem %s1, 888
  %447 = vst [vmem:[%s446] sm:$0xff] %v445

</llo_original>
